<compile_context>
chip_gen: v5e
topology: v5e:2x2
jax: 0.10.0
libtpu: 0.0.40
codegen_flags: <defaults>
</compile_context>

<pallas_src>
import functools

import jax
import jax.numpy as jnp
import numpy as np
from jax.experimental import pallas as pl
from jax.experimental.pallas import tpu as pltpu


def _down_kernel(x_ref, w_ref, b_ref, o_ref, p2_ref, *, ofs, use_im2col):
    # x_ref : (1, Hp, 2, wpp, 2*Cin)  raw NHWC input, row phase on dim 2, column phase
    #                                 packed into the lane dim; W pre-padded with zeros
    #                                 to 2*wpp in the wrapper (wpp sublane-aligned).
    # w_ref : (9*Cin, Cout_p)         3x3 taps flattened into K, Cout padded to 128k.
    # b_ref : (1, Cout_p)             f32 bias.
    # o_ref : (1, M, Cout_p)          M = Hp*wpp; junk cols per row sliced by wrapper.
    # p2_ref: (R, Cin) VMEM scratch   flat zero-ringed pooled map (dtype = mxu_dtype).
    hp = x_ref.shape[1]
    wpp = x_ref.shape[3]
    cin = x_ref.shape[4] // 2
    m = hp * wpp

    # --- 2x2 max-pool (stride 2), fully vectorized ----------------------------
    rowmax = jnp.maximum(x_ref[0, :, 0, :, :], x_ref[0, :, 1, :, :])   # (Hp, wpp, 2*Cin)
    pooled = jnp.maximum(rowmax[..., :cin], rowmax[..., cin:])         # (Hp, wpp, Cin)
    # columns [Wp, wpp) of `pooled` are exact zeros (wrapper padded the input with 0),
    # so they serve as the right border of row h and the left border of row h+1.

    # --- ring zeroing + ONE aligned store into the flat conv buffer -----------
    p2_ref[pl.ds(0, ofs), :] = jnp.zeros((ofs, cin), p2_ref.dtype)           # top ring
    p2_ref[pl.ds(ofs + m, wpp), :] = jnp.zeros((wpp, cin), p2_ref.dtype)     # bottom ring
    p2_ref[pl.ds(ofs, m), :] = pooled.reshape(m, cin).astype(p2_ref.dtype)   # aligned

    # --- 3x3 conv (padding=1) on the MXU ---------------------------------------
    # Tap (ky,kx): output row m0 = h*wpp + w reads flat row start_t + m0, with
    # start_t = ofs - wpp - 1 + ky*wpp + kx (ring rows / junk columns supply zeros).
    starts = [ofs - wpp - 1 + ky * wpp + kx for ky in range(3) for kx in range(3)]
    if use_im2col:
        # Fold the 9 taps into K: one (M, 9*Cin) @ (9*Cin, Cout_p) matmul.
        lhs = jnp.concatenate([p2_ref[pl.ds(s, m), :] for s in starts], axis=-1)
        acc = jnp.dot(lhs, w_ref[...], preferred_element_type=jnp.float32)
    else:
        # Cin already fills the MXU contraction: 9 whole-tile accumulated dots.
        acc = None
        for t, s in enumerate(starts):
            d = jnp.dot(p2_ref[pl.ds(s, m), :],
                        w_ref[pl.ds(t * cin, cin), :],
                        preferred_element_type=jnp.float32)
            acc = d if acc is None else acc + d

    # --- bias + ReLU fused into the single lane-dense store --------------------
    o_ref[0] = jnp.maximum(acc + b_ref[...].astype(jnp.float32), 0.0).astype(o_ref.dtype)


def down_forward(x_nchw, w_oihw, b, *, mxu_dtype=None):
    """Pallas implementation of Down.forward.  x_nchw: (N, Cin, H, W).

    mxu_dtype: dtype of the matmul operands (accumulation is always f32).
      None (default) keeps the input dtype (exact f32); use jnp.bfloat16 on v6e/v7x
      once the matmul dominates.
    """
    N, Cin, H, W = x_nchw.shape
    Cout = w_oihw.shape[0]
    assert H % 2 == 0 and W % 2 == 0, "MaxPool2d(2) expects even spatial dims"
    Hp, Wp = H // 2, W // 2

    if mxu_dtype is None:
        mxu_dtype = x_nchw.dtype
    mxu_dtype = jnp.dtype(mxu_dtype)

    sub = max(8, 32 // mxu_dtype.itemsize)        # packed sublane tile of scratch dtype
    wpp = ((Wp + 2 + sub - 1) // sub) * sub       # padded pooled row length (aligned)
    ofs = ((wpp + 1 + sub - 1) // sub) * sub      # first data row in the flat buffer
    M = Hp * wpp                                  # matmul M / flat output rows
    R = ofs + (Hp + 1) * wpp + sub                # scratch rows (covers max tap overrun)
    Cout_p = ((Cout + 127) // 128) * 128          # lane-dense output channels
    use_im2col = Cin < 256                        # fold taps into K when K underfills MXU

    # ---- layout glue: one transpose+pad copy + free contiguous reshape --------
    x = jnp.transpose(x_nchw, (0, 2, 3, 1))                      # NCHW -> NHWC
    x = jnp.pad(x, ((0, 0), (0, 0), (0, 2 * wpp - W), (0, 0)))   # zero-pad W -> 2*wpp
    x = x.reshape(N, Hp, 2, wpp, 2 * Cin)                        # contiguous reshape

    # weights: (Cout,Cin,3,3) -> (9*Cin, Cout_p), pre-cast to the MXU operand dtype
    w = jnp.transpose(w_oihw, (2, 3, 1, 0)).reshape(9 * Cin, Cout)
    w = jnp.pad(w, ((0, 0), (0, Cout_p - Cout))).astype(mxu_dtype)
    b2 = jnp.pad(b, (0, Cout_p - Cout)).reshape(1, Cout_p).astype(jnp.float32)

    kernel = functools.partial(_down_kernel, ofs=ofs, use_im2col=use_im2col)

    # explicit VMEM budget: double-buffered in/out blocks + weights + scratch + values
    xb = x.dtype.itemsize
    est = (2 * Hp * 2 * wpp * 2 * Cin * xb            # input block x2
           + 2 * M * Cout_p * xb                      # output block x2
           + 9 * Cin * Cout_p * mxu_dtype.itemsize    # weights
           + R * Cin * mxu_dtype.itemsize             # flat pooled scratch
           + M * Cout_p * 4                           # f32 accumulator
           + (M * 9 * Cin * mxu_dtype.itemsize if use_im2col else 0))
    vmem_limit = int(min(112 * 2**20, max(32 * 2**20, 2 * est)))

    out_flat = pl.pallas_call(
        kernel,
        out_shape=jax.ShapeDtypeStruct((N, M, Cout_p), x.dtype),
        grid=(N,),
        in_specs=[
            pl.BlockSpec((1, Hp, 2, wpp, 2 * Cin), lambda n: (n, 0, 0, 0, 0)),
            pl.BlockSpec((9 * Cin, Cout_p), lambda n: (0, 0)),
            pl.BlockSpec((1, Cout_p), lambda n: (0, 0)),
        ],
        out_specs=pl.BlockSpec((1, M, Cout_p), lambda n: (n, 0, 0)),
        scratch_shapes=[pltpu.VMEM((R, Cin), mxu_dtype)],
        compiler_params=pltpu.CompilerParams(
            dimension_semantics=("parallel",),
            vmem_limit_bytes=vmem_limit),
    )(x, w, b2)

    # drop the per-row junk columns and the Cout padding; back to NCHW
    out = out_flat.reshape(N, Hp, wpp, Cout_p)[:, :, :Wp, :Cout]
    return jnp.transpose(out, (0, 3, 1, 2))           # (N, Cout, Hp, Wp)


def down_reference(x_nchw, w_oihw, b):
    """Pure-JAX reference matching the PyTorch semantics (NCHW)."""
    pooled = jax.lax.reduce_window(x_nchw, -jnp.inf, jax.lax.max,
                                   (1, 1, 2, 2), (1, 1, 2, 2), 'VALID')
    y = jax.lax.conv_general_dilated(
        pooled, w_oihw, window_strides=(1, 1), padding=((1, 1), (1, 1)),
        dimension_numbers=('NCHW', 'OIHW', 'NCHW'))
    return jnp.maximum(y + b.reshape(1, -1, 1, 1), 0.0)


if __name__ == "__main__":
    key = jax.random.PRNGKey(0)
    kx, kw, kb = jax.random.split(key, 3)

    # Down(in_channels=4, out_channels=8), input (N=2, C=4, H=16, W=16)
    N, Cin, H, W, Cout = 2, 4, 16, 16, 8
    x = jax.random.normal(kx, (N, Cin, H, W), dtype=jnp.float32)
    w = 0.1 * jax.random.normal(kw, (Cout, Cin, 3, 3), dtype=jnp.float32)
    b = 0.1 * jax.random.normal(kb, (Cout,), dtype=jnp.float32)

    out = jax.block_until_ready(down_forward(x, w, b))
    ref = jax.block_until_ready(down_reference(x, w, b))

    assert out.shape == (N, Cout, H // 2, W // 2), out.shape
    np.testing.assert_allclose(np.asarray(out), np.asarray(ref),
                               rtol=1e-5, atol=1e-5)
    print("KERNEL_OK")
</pallas_src>

<mosaic_0001>
module attributes {stable_mosaic.version = 11 : i64} {
  func.func @_down_kernel(%arg0: i32, %arg1: memref<1x8x2x16x8xf32, #tpu.memory_space<vmem>>, %arg2: memref<36x128xf32, #tpu.memory_space<vmem>>, %arg3: memref<1x128xf32, #tpu.memory_space<vmem>>, %arg4: memref<1x128x128xf32, #tpu.memory_space<vmem>>, %arg5: memref<176x4xf32, #tpu.memory_space<vmem>>) attributes {dimension_semantics = [#tpu.dimension_semantics<parallel>], iteration_bounds = array<i64: 2>, scalar_prefetch = 0 : i64, scratch_operands = 1 : i64, tpu.core_type = #tpu.core_type<tc>, window_params = [{transform_indices = @transform_0, window_bounds = array<i64: 1, 8, 2, 16, 8>}, {pipeline_mode = #tpu.pipeline_mode<synchronous>, transform_indices = @transform_1, window_bounds = array<i64: 36, 128>}, {pipeline_mode = #tpu.pipeline_mode<synchronous>, transform_indices = @transform_2, window_bounds = array<i64: 1, 128>}, {transform_indices = @transform_3, window_bounds = array<i64: 1, 128, 128>}]} {
    %c0 = arith.constant 0 : index
    %c0_0 = arith.constant 0 : index
    %c0_1 = arith.constant 0 : index
    %c0_2 = arith.constant 0 : index
    %c0_3 = arith.constant 0 : index
    %0 = vector.load %arg1[%c0, %c0_0, %c0_1, %c0_2, %c0_3] : memref<1x8x2x16x8xf32, #tpu.memory_space<vmem>>, vector<1x8x1x16x8xf32>
    %1 = vector.shape_cast %0 : vector<1x8x1x16x8xf32> to vector<8x16x8xf32>
    %c0_4 = arith.constant 0 : index
    %c0_5 = arith.constant 0 : index
    %c1 = arith.constant 1 : index
    %c0_6 = arith.constant 0 : index
    %c0_7 = arith.constant 0 : index
    %2 = vector.load %arg1[%c0_4, %c0_5, %c1, %c0_6, %c0_7] : memref<1x8x2x16x8xf32, #tpu.memory_space<vmem>>, vector<1x8x1x16x8xf32>
    %3 = vector.shape_cast %2 : vector<1x8x1x16x8xf32> to vector<8x16x8xf32>
    %4 = arith.maximumf %1, %3 : vector<8x16x8xf32>
    %5 = vector.extract_strided_slice %4 {offsets = [0, 0, 0], sizes = [8, 16, 4], strides = [1, 1, 1]} : vector<8x16x8xf32> to vector<8x16x4xf32>
    %6 = vector.extract_strided_slice %4 {offsets = [0, 0, 4], sizes = [8, 16, 4], strides = [1, 1, 1]} : vector<8x16x8xf32> to vector<8x16x4xf32>
    %7 = arith.maximumf %5, %6 : vector<8x16x4xf32>
    %cst = arith.constant 0.000000e+00 : f32
    %8 = vector.broadcast %cst : f32 to vector<24x4xf32>
    %c0_8 = arith.constant 0 : index
    %c0_9 = arith.constant 0 : index
    %9 = vector.load %arg5[%c0_8, %c0_9] : memref<176x4xf32, #tpu.memory_space<vmem>>, vector<24x4xf32>
    tpu.vector_store %arg5[%c0_8, %c0_9], %8 {strides = array<i32>} : memref<176x4xf32, #tpu.memory_space<vmem>>, vector<24x4xf32>,
    %cst_10 = arith.constant 0.000000e+00 : f32
    %10 = vector.broadcast %cst_10 : f32 to vector<16x4xf32>
    %c152 = arith.constant 152 : index
    %c0_11 = arith.constant 0 : index
    %11 = vector.load %arg5[%c152, %c0_11] : memref<176x4xf32, #tpu.memory_space<vmem>>, vector<16x4xf32>
    tpu.vector_store %arg5[%c152, %c0_11], %10 {strides = array<i32>} : memref<176x4xf32, #tpu.memory_space<vmem>>, vector<16x4xf32>,
    %12 = vector.shape_cast %7 : vector<8x16x4xf32> to vector<128x4xf32>
    %c24 = arith.constant 24 : index
    %c0_12 = arith.constant 0 : index
    %13 = vector.load %arg5[%c24, %c0_12] : memref<176x4xf32, #tpu.memory_space<vmem>>, vector<128x4xf32>
    tpu.vector_store %arg5[%c24, %c0_12], %12 {strides = array<i32>} : memref<176x4xf32, #tpu.memory_space<vmem>>, vector<128x4xf32>,
    %c7 = arith.constant 7 : index
    %c0_13 = arith.constant 0 : index
    %14 = vector.load %arg5[%c7, %c0_13] : memref<176x4xf32, #tpu.memory_space<vmem>>, vector<128x4xf32>
    %c8 = arith.constant 8 : index
    %c0_14 = arith.constant 0 : index
    %15 = vector.load %arg5[%c8, %c0_14] : memref<176x4xf32, #tpu.memory_space<vmem>>, vector<128x4xf32>
    %c9 = arith.constant 9 : index
    %c0_15 = arith.constant 0 : index
    %16 = vector.load %arg5[%c9, %c0_15] : memref<176x4xf32, #tpu.memory_space<vmem>>, vector<128x4xf32>
    %c23 = arith.constant 23 : index
    %c0_16 = arith.constant 0 : index
    %17 = vector.load %arg5[%c23, %c0_16] : memref<176x4xf32, #tpu.memory_space<vmem>>, vector<128x4xf32>
    %c24_17 = arith.constant 24 : index
    %c0_18 = arith.constant 0 : index
    %18 = vector.load %arg5[%c24_17, %c0_18] : memref<176x4xf32, #tpu.memory_space<vmem>>, vector<128x4xf32>
    %c25 = arith.constant 25 : index
    %c0_19 = arith.constant 0 : index
    %19 = vector.load %arg5[%c25, %c0_19] : memref<176x4xf32, #tpu.memory_space<vmem>>, vector<128x4xf32>
    %c39 = arith.constant 39 : index
    %c0_20 = arith.constant 0 : index
    %20 = vector.load %arg5[%c39, %c0_20] : memref<176x4xf32, #tpu.memory_space<vmem>>, vector<128x4xf32>
    %c40 = arith.constant 40 : index
    %c0_21 = arith.constant 0 : index
    %21 = vector.load %arg5[%c40, %c0_21] : memref<176x4xf32, #tpu.memory_space<vmem>>, vector<128x4xf32>
    %c41 = arith.constant 41 : index
    %c0_22 = arith.constant 0 : index
    %22 = vector.load %arg5[%c41, %c0_22] : memref<176x4xf32, #tpu.memory_space<vmem>>, vector<128x4xf32>
    %23 = tpu.concatenate %14, %15, %16, %17, %18, %19, %20, %21, %22 in 1 : vector<128x4xf32>, vector<128x4xf32>, vector<128x4xf32>, vector<128x4xf32>, vector<128x4xf32>, vector<128x4xf32>, vector<128x4xf32>, vector<128x4xf32>, vector<128x4xf32> -> vector<128x36xf32>
    %c0_23 = arith.constant 0 : index
    %c0_24 = arith.constant 0 : index
    %24 = vector.load %arg2[%c0_23, %c0_24] : memref<36x128xf32, #tpu.memory_space<vmem>>, vector<36x128xf32>
    %cst_25 = arith.constant dense<0.000000e+00> : vector<128x128xf32>
    %25 = tpu.matmul %23, %24, %cst_25 {dimension_numbers = #tpu.dot_dimension_numbers<[1], [0], [0], [1], [0, 0, 1, 1], [], []>} : vector<128x36xf32>, vector<36x128xf32>, vector<128x128xf32> -> vector<128x128xf32>
    %c0_26 = arith.constant 0 : index
    %c0_27 = arith.constant 0 : index
    %26 = vector.load %arg3[%c0_26, %c0_27] : memref<1x128xf32, #tpu.memory_space<vmem>>, vector<1x128xf32>
    %27 = vector.broadcast %26 : vector<1x128xf32> to vector<128x128xf32>
    %28 = arith.addf %25, %27 : vector<128x128xf32>
    %cst_28 = arith.constant 0.000000e+00 : f32
    %29 = vector.broadcast %cst_28 : f32 to vector<128x128xf32>
    %30 = arith.maximumf %28, %29 : vector<128x128xf32>
    %c0_29 = arith.constant 0 : index
    %c0_30 = arith.constant 0 : index
    %c0_31 = arith.constant 0 : index
    %31 = vector.load %arg4[%c0_29, %c0_30, %c0_31] : memref<1x128x128xf32, #tpu.memory_space<vmem>>, vector<1x128x128xf32>
    %32 = vector.shape_cast %31 : vector<1x128x128xf32> to vector<128x128xf32>
    %33 = vector.shape_cast %30 : vector<128x128xf32> to vector<1x128x128xf32>
    tpu.vector_store %arg4[%c0_29, %c0_30, %c0_31], %33 {strides = array<i32>} : memref<1x128x128xf32, #tpu.memory_space<vmem>>, vector<1x128x128xf32>,
    return
  }
  func.func @transform_0(%arg0: i32) -> (i32, i32, i32, i32, i32) {
    %c0_i32 = arith.constant 0 : i32
    %c0_i32_0 = arith.constant 0 : i32
    %c0_i32_1 = arith.constant 0 : i32
    %c0_i32_2 = arith.constant 0 : i32
    %c0_i32_3 = arith.constant 0 : i32
    return %arg0, %c0_i32, %c0_i32_0, %c0_i32_1, %c0_i32_2 : i32, i32, i32, i32, i32
  }
  func.func @transform_1(%arg0: i32) -> (i32, i32) {
    %c0_i32 = arith.constant 0 : i32
    %c0_i32_0 = arith.constant 0 : i32
    %c0_i32_1 = arith.constant 0 : i32
    return %c0_i32, %c0_i32_0 : i32, i32
  }
  func.func @transform_2(%arg0: i32) -> (i32, i32) {
    %c0_i32 = arith.constant 0 : i32
    %c0_i32_0 = arith.constant 0 : i32
    %c0_i32_1 = arith.constant 0 : i32
    return %c0_i32, %c0_i32_0 : i32, i32
  }
  func.func @transform_3(%arg0: i32) -> (i32, i32, i32) {
    %c0_i32 = arith.constant 0 : i32
    %c0_i32_0 = arith.constant 0 : i32
    %c0_i32_1 = arith.constant 0 : i32
    return %arg0, %c0_i32, %c0_i32_0 : i32, i32, i32
  }
}

</mosaic_0001>

<llo_original>
// kernel: tpu_custom_call.1
$region0: #{tpu_custom_call.1}
  #allocation0 [shape = 'u32[]', space=smem, size = 0x4, offset = 0x4, fixed_abs, tag = 'smem constant byte address 0x4 - core index']
  #allocation1 [shape = 'u32[72,128]{1,0:T(1,128)}', space=vmem, size = 0x9000, scoped, tag = 'internal scratch']
  #allocation2 [shape = 'f32[176,4]{1,0:T(8,128)}', space=vmem, size = 0x16000, scoped, tag = 'scratch operand']
  %s0 = inlined_call_operand.vmem [shape: f32[2,8,2,16,8], index: 0, kind: input, shape index: {}]
  %s1 = inlined_call_operand.vmem [shape: f32[36,128], index: 1, kind: input, shape index: {}]
  %s2 = inlined_call_operand.vmem [shape: f32[1,128], index: 2, kind: input, shape index: {}]
  %s3 = inlined_call_operand.hbm [shape: f32[2,128,128], index: 3, kind: output, shape index: {}]
  %s4 = sld [smem:[#allocation0]]
  $region45: #{tpu_custom_call.1} parent=0
    _
  %s6 = ssub.s32 1, %s4
  %s7 = scalar_select 0, %s6, %s4
  $region1: #{tpu_custom_call.1} parent=0
    #allocation3 [shape = 'u8[131072]{0}', space=vmem, size = 0x20000, scoped, tag = 'output window, operand 0']
    #allocation4 [shape = 's32[2]{0}', space=sflag, size = 0x8, scoped, tag = 'scoped memory for tpu_custom_call.1']
    %8 = vsyncpa [#allocation4], 0
    %s9 = scalar_lea.sflag [#allocation4], 1
    %10 = vsyncpa %s9, 0
    loop: start=0, step=1, limit=4
    $region2: #{tpu_custom_call.1} parent=1 // loop_pre_header
      _
    $region3: #{tpu_custom_call.1} parent=1 // loop_header
      %s12 = sphi 0, %s16
      %p13 = scmp.ge.s32.totalorder %s12, 4
      %s22 = sphi 0, %s24
      %s25 = sphi 0, %s22
      %s26 = sphi 0, %s25
      %s42 = sphi 0, %s26
      %s46 = sphi 0, %s46
      %s48 = sphi 0, %s46
      %s49 = sphi 0, %s48
      %s63 = sphi 0, %s49
      %s67 = sphi 0, %s67
      %s69 = sphi 0, %s67
      %s70 = sphi 0, %s69
      %s84 = sphi 0, %s70
      %s90 = sphi 0, %s92
      %s93 = sphi 0, %s90
      %s94 = sphi 0, %s93
      %s110 = sphi 0, %s94
    $region4: #{tpu_custom_call.1} parent=1 // loop_header_branch
      %15 = sbr.rel (%p13) target = $region8
    $region5: #{tpu_custom_call.1} parent=1 // loop_body
      %s17 = ssub.s32 %s12, 1
      %s18 = ssub.s32 %s12, 2
      %s19 = sadd.s32 %s12, 1
      %s20 = ssub.s32 %s12, %s19
      %p21 = scmp.eq.s32.totalorder %s20, 0
      %s23 = sadd.s32 %s22, 1
      %s24 = scalar_select %p21, %s22, %s23
      %p27 = pneg %p21
      %p28 = scmp.eq.s32.totalorder %s12, 1
      %p29 = por %p27, %p28
      %p30 = scmp.ne.s32.totalorder %s22, %s25
      %p31 = scmp.eq.s32.totalorder %s12, 0
      %p32 = por %p30, %p31
      %p33 = scmp.ne.s32.totalorder %s22, %s25
      %p34 = scmp.eq.s32.totalorder %s17, 1
      %p35 = por %p33, %p34
      %p36 = scmp.ne.s32.totalorder %s25, %s26
      %p37 = scmp.eq.s32.totalorder %s17, 0
      %p38 = por %p36, %p37
      %p39 = scmp.ne.s32.totalorder %s25, %s26
      %p40 = scmp.eq.s32.totalorder %s18, 1
      %p41 = por %p39, %p40
      %p43 = scmp.ne.s32.totalorder %s26, %s42
      %p44 = scmp.eq.s32.totalorder %s18, 0
      %p45 = por %p43, %p44
      %s47 = sadd.s32 %s46, 1
      %p50 = scmp.eq.s32.totalorder %s12, 1
      %p51 = scmp.ne.s32.totalorder %s46, %s48
      %p52 = scmp.eq.s32.totalorder %s12, 0
      %p53 = por %p51, %p52
      %p54 = scmp.ne.s32.totalorder %s46, %s48
      %p55 = scmp.eq.s32.totalorder %s17, 1
      %p56 = por %p54, %p55
      %p57 = scmp.ne.s32.totalorder %s48, %s49
      %p58 = scmp.eq.s32.totalorder %s17, 0
      %p59 = por %p57, %p58
      %p60 = scmp.ne.s32.totalorder %s48, %s49
      %p61 = scmp.eq.s32.totalorder %s18, 1
      %p62 = por %p60, %p61
      %p64 = scmp.ne.s32.totalorder %s49, %s63
      %p65 = scmp.eq.s32.totalorder %s18, 0
      %p66 = por %p64, %p65
      %s68 = sadd.s32 %s67, 1
      %p71 = scmp.eq.s32.totalorder %s12, 1
      %p72 = scmp.ne.s32.totalorder %s67, %s69
      %p73 = scmp.eq.s32.totalorder %s12, 0
      %p74 = por %p72, %p73
      %p75 = scmp.ne.s32.totalorder %s67, %s69
      %p76 = scmp.eq.s32.totalorder %s17, 1
      %p77 = por %p75, %p76
      %p78 = scmp.ne.s32.totalorder %s69, %s70
      %p79 = scmp.eq.s32.totalorder %s17, 0
      %p80 = por %p78, %p79
      %p81 = scmp.ne.s32.totalorder %s69, %s70
      %p82 = scmp.eq.s32.totalorder %s18, 1
      %p83 = por %p81, %p82
      %p85 = scmp.ne.s32.totalorder %s70, %s84
      %p86 = scmp.eq.s32.totalorder %s18, 0
      %p87 = por %p85, %p86
      %s88 = ssub.s32 %s12, %s19
      %p89 = scmp.eq.s32.totalorder %s88, 0
      %s91 = sadd.s32 %s90, 1
      %s92 = scalar_select %p89, %s90, %s91
      %p95 = pneg %p89
      %p96 = scmp.eq.s32.totalorder %s12, 1
      %p97 = por %p95, %p96
      %p98 = scmp.ne.s32.totalorder %s90, %s93
      %p99 = scmp.eq.s32.totalorder %s12, 0
      %p100 = por %p98, %p99
      %p101 = scmp.ne.s32.totalorder %s90, %s93
      %p102 = scmp.eq.s32.totalorder %s17, 1
      %p103 = por %p101, %p102
      %p104 = scmp.ne.s32.totalorder %s93, %s94
      %p105 = scmp.eq.s32.totalorder %s17, 0
      %p106 = por %p104, %p105
      %p107 = scmp.ne.s32.totalorder %s93, %s94
      %p108 = scmp.eq.s32.totalorder %s18, 1
      %p109 = por %p107, %p108
      %p111 = scmp.ne.s32.totalorder %s94, %s110
      %p112 = scmp.eq.s32.totalorder %s18, 0
      %p113 = por %p111, %p112
      %p114 = scmp.le.s32.totalorder 1, %s12
      %p115 = scmp.lt.s32.totalorder %s12, 3
      %p116 = pnand %p114, %p115
      %p117 = pneg %p116
      // Predicated region
      $region9: #{tpu_custom_call.1} parent=5 // pred_check
        _
      $region10: #{tpu_custom_call.1} parent=5 // pred_check_branch
        %119 = sbr.rel (%p116) target = $region12
      $region11: #{tpu_custom_call.1} parent=5 // pred_region
        %s120 = ssub.s32 %s12, 1
        // Predicated region
        $region13: #{tpu_custom_call.1} parent=11 // pred_check
          %p121 = pneg %p59
        $region14: #{tpu_custom_call.1} parent=11 // pred_check_branch
          %123 = sbr.rel (%p121) target = $region16
        $region15: #{tpu_custom_call.1} parent=11 // pred_region
          _
        $region16: #{tpu_custom_call.1} parent=11 // pred_fallthru
          _
        // Predicated region
        $region17: #{tpu_custom_call.1} parent=11 // pred_check
          %p124 = pneg %p80
        $region18: #{tpu_custom_call.1} parent=11 // pred_check_branch
          %126 = sbr.rel (%p124) target = $region20
        $region19: #{tpu_custom_call.1} parent=11 // pred_region
          _
        $region20: #{tpu_custom_call.1} parent=11 // pred_fallthru
          _
      $region12: #{tpu_custom_call.1} parent=5 // pred_fallthru
        _
      %p127 = scmp.lt.s32.totalorder %s12, 2
      // Predicated region
      $region21: #{tpu_custom_call.1} parent=5 // pred_check
        %p128 = pneg %p127
      $region22: #{tpu_custom_call.1} parent=5 // pred_check_branch
        %130 = sbr.rel (%p128) target = $region24
      $region23: #{tpu_custom_call.1} parent=5 // pred_region
        // Predicated region
        $region25: #{tpu_custom_call.1} parent=23 // pred_check
          %p131 = pneg %p32
        $region26: #{tpu_custom_call.1} parent=23 // pred_check_branch
          %133 = sbr.rel (%p131) target = $region28
        $region27: #{tpu_custom_call.1} parent=23 // pred_region
          %p134 = scmp.lt.s32.totalorder %s12, 1
          %s135 = scalar_select %p134, %s12, 1
          %s136 = smul.addr %s135, 32
          %s137 = smul.addr %s136, 8
          %s138 = scalar_lea.vmem %s0, %s137
        $region28: #{tpu_custom_call.1} parent=23 // pred_fallthru
          _
      $region24: #{tpu_custom_call.1} parent=5 // pred_fallthru
        _
      %p139 = scmp.le.s32.totalorder 1, %s12
      %p140 = scmp.lt.s32.totalorder %s12, 3
      %p141 = pnand %p139, %p140
      %p142 = pneg %p141
      // Predicated region
      $region29: #{tpu_custom_call.1} parent=5 // pred_check
        _
      $region30: #{tpu_custom_call.1} parent=5 // pred_check_branch
        %144 = sbr.rel (%p141) target = $region32
      $region31: #{tpu_custom_call.1} parent=5 // pred_region
        %s145 = ssub.s32 %s12, 1
        %p146 = scmp.lt.s32.totalorder %s17, 1
        %s147 = scalar_select %p146, %s17, 1
        %s148 = smul.addr %s147, 32
        %s149 = smul.addr %s148, 8
        %s150 = scalar_lea.vmem %s0, %s149
        %p151 = pneg %p38
        %p152 = pneg %p35
        %p153 = pneg %p59
        %p154 = pneg %p56
        %p155 = pneg %p80
        %p156 = pneg %p77
        %p157 = pneg %p106
        %p158 = pneg %p103
        %s159 = sand.u32 %s93, 1
        %s160 = scalar_lea.sflag [#allocation4], %s159
        %s161 = sand.u32 %s93, 1
        %s162 = smul.addr %s161, 128
        %s163 = scalar_lea.vmem [#allocation3], %s162
        %p164 = scmp.lt.s32.totalorder %s17, 1
        %s165 = scalar_select %p164, %s17, 1
        %s166 = smul.addr %s165, 32
        %s167 = smul.addr %s166, 8
        %s168 = scalar_lea.vmem %s0, %s167
        %v169 = vld [vmem:[%s168] sm:$0xff]
        %v170 = vld [vmem:[%s168 + $0x8] sm:$0xff]
        %v171 = vld [vmem:[%s168 + $0x20] sm:$0xff]
        %v172 = vld [vmem:[%s168 + $0x28] sm:$0xff]
        %v173 = vld [vmem:[%s168 + $0x40] sm:$0xff]
        %v174 = vld [vmem:[%s168 + $0x48] sm:$0xff]
        %v175 = vld [vmem:[%s168 + $0x60] sm:$0xff]
        %v176 = vld [vmem:[%s168 + $0x68] sm:$0xff]
        %v177 = vld [vmem:[%s168 + $0x80] sm:$0xff]
        %v178 = vld [vmem:[%s168 + $0x88] sm:$0xff]
        %v179 = vld [vmem:[%s168 + $0xa0] sm:$0xff]
        %v180 = vld [vmem:[%s168 + $0xa8] sm:$0xff]
        %v181 = vld [vmem:[%s168 + $0xc0] sm:$0xff]
        %v182 = vld [vmem:[%s168 + $0xc8] sm:$0xff]
        %v183 = vld [vmem:[%s168 + $0xe0] sm:$0xff]
        %v184 = vld [vmem:[%s168 + $0xe8] sm:$0xff]
        %s185 = scalar_lea.vmem %s168, 16
        %v186 = vld [vmem:[%s185] sm:$0xff]
        %v187 = vld [vmem:[%s185 + $0x8] sm:$0xff]
        %v188 = vld [vmem:[%s185 + $0x20] sm:$0xff]
        %v189 = vld [vmem:[%s185 + $0x28] sm:$0xff]
        %v190 = vld [vmem:[%s185 + $0x40] sm:$0xff]
        %v191 = vld [vmem:[%s185 + $0x48] sm:$0xff]
        %v192 = vld [vmem:[%s185 + $0x60] sm:$0xff]
        %v193 = vld [vmem:[%s185 + $0x68] sm:$0xff]
        %v194 = vld [vmem:[%s185 + $0x80] sm:$0xff]
        %v195 = vld [vmem:[%s185 + $0x88] sm:$0xff]
        %v196 = vld [vmem:[%s185 + $0xa0] sm:$0xff]
        %v197 = vld [vmem:[%s185 + $0xa8] sm:$0xff]
        %v198 = vld [vmem:[%s185 + $0xc0] sm:$0xff]
        %v199 = vld [vmem:[%s185 + $0xc8] sm:$0xff]
        %v200 = vld [vmem:[%s185 + $0xe0] sm:$0xff]
        %v201 = vld [vmem:[%s185 + $0xe8] sm:$0xff]
        %v202 = vmax.f32 %v169, %v186
        %v203 = vmax.f32 %v170, %v187
        %v204 = vmax.f32 %v171, %v188
        %v205 = vmax.f32 %v172, %v189
        %v206 = vmax.f32 %v173, %v190
        %v207 = vmax.f32 %v174, %v191
        %v208 = vmax.f32 %v175, %v192
        %v209 = vmax.f32 %v176, %v193
        %v210 = vmax.f32 %v177, %v194
        %v211 = vmax.f32 %v178, %v195
        %v212 = vmax.f32 %v179, %v196
        %v213 = vmax.f32 %v180, %v197
        %v214 = vmax.f32 %v181, %v198
        %v215 = vmax.f32 %v182, %v199
        %v216 = vmax.f32 %v183, %v200
        %v217 = vmax.f32 %v184, %v201
        %234 = vrot.lane.b32.xlu0 %v202, 124
        %v235 = vpop.permute.xlu0 %234
        %236 = vrot.lane.b32.xlu0 %v203, 124
        %v237 = vpop.permute.xlu0 %236
        %238 = vrot.lane.b32.xlu0 %v204, 124
        %v239 = vpop.permute.xlu0 %238
        %240 = vrot.lane.b32.xlu0 %v205, 124
        %v241 = vpop.permute.xlu0 %240
        %242 = vrot.lane.b32.xlu0 %v206, 124
        %v243 = vpop.permute.xlu0 %242
        %244 = vrot.lane.b32.xlu0 %v207, 124
        %v245 = vpop.permute.xlu0 %244
        %246 = vrot.lane.b32.xlu0 %v208, 124
        %v247 = vpop.permute.xlu0 %246
        %248 = vrot.lane.b32.xlu0 %v209, 124
        %v249 = vpop.permute.xlu0 %248
        %250 = vrot.lane.b32.xlu0 %v210, 124
        %v251 = vpop.permute.xlu0 %250
        %252 = vrot.lane.b32.xlu0 %v211, 124
        %v253 = vpop.permute.xlu0 %252
        %254 = vrot.lane.b32.xlu0 %v212, 124
        %v255 = vpop.permute.xlu0 %254
        %256 = vrot.lane.b32.xlu0 %v213, 124
        %v257 = vpop.permute.xlu0 %256
        %258 = vrot.lane.b32.xlu0 %v214, 124
        %v259 = vpop.permute.xlu0 %258
        %260 = vrot.lane.b32.xlu0 %v215, 124
        %v261 = vpop.permute.xlu0 %260
        %262 = vrot.lane.b32.xlu0 %v216, 124
        %v263 = vpop.permute.xlu0 %262
        %264 = vrot.lane.b32.xlu0 %v217, 124
        %v265 = vpop.permute.xlu0 %264
        %v282 = vmax.f32 %v202, %v235
        %v283 = vmax.f32 %v203, %v237
        %v284 = vmax.f32 %v204, %v239
        %v285 = vmax.f32 %v205, %v241
        %v286 = vmax.f32 %v206, %v243
        %v287 = vmax.f32 %v207, %v245
        %v288 = vmax.f32 %v208, %v247
        %v289 = vmax.f32 %v209, %v249
        %v290 = vmax.f32 %v210, %v251
        %v291 = vmax.f32 %v211, %v253
        %v292 = vmax.f32 %v212, %v255
        %v293 = vmax.f32 %v213, %v257
        %v294 = vmax.f32 %v214, %v259
        %v295 = vmax.f32 %v215, %v261
        %v296 = vmax.f32 %v216, %v263
        %v297 = vmax.f32 %v217, %v265
        %vm298 = vcmask 31744
        %299 = vst.msk [vmem:[#allocation2] sm:$0xff] %vm298, 0.0
        %300 = vst.msk [vmem:[#allocation2 + $0x8] sm:$0xff] %vm298, 0.0
        %301 = vst.msk [vmem:[#allocation2 + $0x10] sm:$0xff] %vm298, 0.0
        %302 = vst.msk [vmem:[#allocation2 + $0x98] sm:$0xff] %vm298, 0.0
        %303 = vst.msk [vmem:[#allocation2 + $0xa0] sm:$0xff] %vm298, 0.0
        %304 = vst.msk [vmem:[#allocation2 + $0x18] sm:$0xff] %vm298, %v282
        %305 = vst.msk [vmem:[#allocation2 + $0x20] sm:$0xff] %vm298, %v283
        %306 = vst.msk [vmem:[#allocation2 + $0x28] sm:$0xff] %vm298, %v284
        %307 = vst.msk [vmem:[#allocation2 + $0x30] sm:$0xff] %vm298, %v285
        %308 = vst.msk [vmem:[#allocation2 + $0x38] sm:$0xff] %vm298, %v286
        %309 = vst.msk [vmem:[#allocation2 + $0x40] sm:$0xff] %vm298, %v287
        %310 = vst.msk [vmem:[#allocation2 + $0x48] sm:$0xff] %vm298, %v288
        %311 = vst.msk [vmem:[#allocation2 + $0x50] sm:$0xff] %vm298, %v289
        %312 = vst.msk [vmem:[#allocation2 + $0x58] sm:$0xff] %vm298, %v290
        %313 = vst.msk [vmem:[#allocation2 + $0x60] sm:$0xff] %vm298, %v291
        %314 = vst.msk [vmem:[#allocation2 + $0x68] sm:$0xff] %vm298, %v292
        %315 = vst.msk [vmem:[#allocation2 + $0x70] sm:$0xff] %vm298, %v293
        %316 = vst.msk [vmem:[#allocation2 + $0x78] sm:$0xff] %vm298, %v294
        %317 = vst.msk [vmem:[#allocation2 + $0x80] sm:$0xff] %vm298, %v295
        %318 = vst.msk [vmem:[#allocation2 + $0x88] sm:$0xff] %vm298, %v296
        %319 = vst.msk [vmem:[#allocation2 + $0x90] sm:$0xff] %vm298, %v297
        %v320 = vld [vmem:[#allocation2 + $0x7] sm:$0xff]
        %v321 = vld [vmem:[#allocation2 + $0xf] sm:$0xff]
        %v322 = vld [vmem:[#allocation2 + $0x17] sm:$0xff]
        %v323 = vld [vmem:[#allocation2 + $0x1f] sm:$0xff]
        %v324 = vld [vmem:[#allocation2 + $0x27] sm:$0xff]
        %v325 = vld [vmem:[#allocation2 + $0x2f] sm:$0xff]
        %v326 = vld [vmem:[#allocation2 + $0x37] sm:$0xff]
        %v327 = vld [vmem:[#allocation2 + $0x3f] sm:$0xff]
        %v328 = vld [vmem:[#allocation2 + $0x47] sm:$0xff]
        %v329 = vld [vmem:[#allocation2 + $0x4f] sm:$0xff]
        %v330 = vld [vmem:[#allocation2 + $0x57] sm:$0xff]
        %v331 = vld [vmem:[#allocation2 + $0x5f] sm:$0xff]
        %v332 = vld [vmem:[#allocation2 + $0x67] sm:$0xff]
        %v333 = vld [vmem:[#allocation2 + $0x6f] sm:$0xff]
        %v334 = vld [vmem:[#allocation2 + $0x77] sm:$0xff]
        %v335 = vld [vmem:[#allocation2 + $0x7f] sm:$0xff]
        %v336 = vld [vmem:[#allocation2 + $0x8] sm:$0xff]
        %v337 = vld [vmem:[#allocation2 + $0x10] sm:$0xff]
        %v338 = vld [vmem:[#allocation2 + $0x18] sm:$0xff]
        %v339 = vld [vmem:[#allocation2 + $0x20] sm:$0xff]
        %v340 = vld [vmem:[#allocation2 + $0x28] sm:$0xff]
        %v341 = vld [vmem:[#allocation2 + $0x30] sm:$0xff]
        %v342 = vld [vmem:[#allocation2 + $0x38] sm:$0xff]
        %v343 = vld [vmem:[#allocation2 + $0x40] sm:$0xff]
        %v344 = vld [vmem:[#allocation2 + $0x48] sm:$0xff]
        %v345 = vld [vmem:[#allocation2 + $0x50] sm:$0xff]
        %v346 = vld [vmem:[#allocation2 + $0x58] sm:$0xff]
        %v347 = vld [vmem:[#allocation2 + $0x60] sm:$0xff]
        %v348 = vld [vmem:[#allocation2 + $0x68] sm:$0xff]
        %v349 = vld [vmem:[#allocation2 + $0x70] sm:$0xff]
        %v350 = vld [vmem:[#allocation2 + $0x78] sm:$0xff]
        %v351 = vld [vmem:[#allocation2 + $0x80] sm:$0xff]
        %v352 = vld [vmem:[#allocation2 + $0x9] sm:$0xff]
        %v353 = vld [vmem:[#allocation2 + $0x11] sm:$0xff]
        %v354 = vld [vmem:[#allocation2 + $0x19] sm:$0xff]
        %v355 = vld [vmem:[#allocation2 + $0x21] sm:$0xff]
        %v356 = vld [vmem:[#allocation2 + $0x29] sm:$0xff]
        %v357 = vld [vmem:[#allocation2 + $0x31] sm:$0xff]
        %v358 = vld [vmem:[#allocation2 + $0x39] sm:$0xff]
        %v359 = vld [vmem:[#allocation2 + $0x41] sm:$0xff]
        %v360 = vld [vmem:[#allocation2 + $0x49] sm:$0xff]
        %v361 = vld [vmem:[#allocation2 + $0x51] sm:$0xff]
        %v362 = vld [vmem:[#allocation2 + $0x59] sm:$0xff]
        %v363 = vld [vmem:[#allocation2 + $0x61] sm:$0xff]
        %v364 = vld [vmem:[#allocation2 + $0x69] sm:$0xff]
        %v365 = vld [vmem:[#allocation2 + $0x71] sm:$0xff]
        %v366 = vld [vmem:[#allocation2 + $0x79] sm:$0xff]
        %v367 = vld [vmem:[#allocation2 + $0x81] sm:$0xff]
        %v368 = vld [vmem:[#allocation2 + $0x87] sm:$0xff]
        %v369 = vld [vmem:[#allocation2 + $0x8f] sm:$0xff]
        %v370 = vld [vmem:[#allocation2 + $0x88] sm:$0xff]
        %v371 = vld [vmem:[#allocation2 + $0x90] sm:$0xff]
        %v372 = vld [vmem:[#allocation2 + $0x89] sm:$0xff]
        %v373 = vld [vmem:[#allocation2 + $0x91] sm:$0xff]
        %v374 = vld [vmem:[#allocation2 + $0x97] sm:$0xff]
        %v375 = vld [vmem:[#allocation2 + $0x9f] sm:$0xff]
        %v376 = vld [vmem:[#allocation2 + $0x98] sm:$0xff]
        %v377 = vld [vmem:[#allocation2 + $0xa0] sm:$0xff]
        %v378 = vld [vmem:[#allocation2 + $0x99] sm:$0xff]
        %v379 = vld [vmem:[#allocation2 + $0xa1] sm:$0xff]
        %396 = vrot.lane.b32.xlu0 %v336, 4
        %v397 = vpop.permute.xlu0 %396
        %398 = vrot.lane.b32.xlu0 %v337, 4
        %v399 = vpop.permute.xlu0 %398
        %400 = vrot.lane.b32.xlu0 %v338, 4
        %v401 = vpop.permute.xlu0 %400
        %402 = vrot.lane.b32.xlu0 %v339, 4
        %v403 = vpop.permute.xlu0 %402
        %404 = vrot.lane.b32.xlu0 %v340, 4
        %v405 = vpop.permute.xlu0 %404
        %406 = vrot.lane.b32.xlu0 %v341, 4
        %v407 = vpop.permute.xlu0 %406
        %408 = vrot.lane.b32.xlu0 %v342, 4
        %v409 = vpop.permute.xlu0 %408
        %410 = vrot.lane.b32.xlu0 %v343, 4
        %v411 = vpop.permute.xlu0 %410
        %412 = vrot.lane.b32.xlu0 %v344, 4
        %v413 = vpop.permute.xlu0 %412
        %414 = vrot.lane.b32.xlu0 %v345, 4
        %v415 = vpop.permute.xlu0 %414
        %416 = vrot.lane.b32.xlu0 %v346, 4
        %v417 = vpop.permute.xlu0 %416
        %418 = vrot.lane.b32.xlu0 %v347, 4
        %v419 = vpop.permute.xlu0 %418
        %420 = vrot.lane.b32.xlu0 %v348, 4
        %v421 = vpop.permute.xlu0 %420
        %422 = vrot.lane.b32.xlu0 %v349, 4
        %v423 = vpop.permute.xlu0 %422
        %424 = vrot.lane.b32.xlu0 %v350, 4
        %v425 = vpop.permute.xlu0 %424
        %426 = vrot.lane.b32.xlu0 %v351, 4
        %v427 = vpop.permute.xlu0 %426
        %460 = vrot.lane.b32.xlu0 %v352, 8
        %v461 = vpop.permute.xlu0 %460
        %462 = vrot.lane.b32.xlu0 %v353, 8
        %v463 = vpop.permute.xlu0 %462
        %464 = vrot.lane.b32.xlu0 %v354, 8
        %v465 = vpop.permute.xlu0 %464
        %466 = vrot.lane.b32.xlu0 %v355, 8
        %v467 = vpop.permute.xlu0 %466
        %468 = vrot.lane.b32.xlu0 %v356, 8
        %v469 = vpop.permute.xlu0 %468
        %470 = vrot.lane.b32.xlu0 %v357, 8
        %v471 = vpop.permute.xlu0 %470
        %472 = vrot.lane.b32.xlu0 %v358, 8
        %v473 = vpop.permute.xlu0 %472
        %474 = vrot.lane.b32.xlu0 %v359, 8
        %v475 = vpop.permute.xlu0 %474
        %476 = vrot.lane.b32.xlu0 %v360, 8
        %v477 = vpop.permute.xlu0 %476
        %478 = vrot.lane.b32.xlu0 %v361, 8
        %v479 = vpop.permute.xlu0 %478
        %480 = vrot.lane.b32.xlu0 %v362, 8
        %v481 = vpop.permute.xlu0 %480
        %482 = vrot.lane.b32.xlu0 %v363, 8
        %v483 = vpop.permute.xlu0 %482
        %484 = vrot.lane.b32.xlu0 %v364, 8
        %v485 = vpop.permute.xlu0 %484
        %486 = vrot.lane.b32.xlu0 %v365, 8
        %v487 = vpop.permute.xlu0 %486
        %488 = vrot.lane.b32.xlu0 %v366, 8
        %v489 = vpop.permute.xlu0 %488
        %490 = vrot.lane.b32.xlu0 %v367, 8
        %v491 = vpop.permute.xlu0 %490
        %524 = vrot.lane.b32.xlu0 %v322, 12
        %v525 = vpop.permute.xlu0 %524
        %526 = vrot.lane.b32.xlu0 %v323, 12
        %v527 = vpop.permute.xlu0 %526
        %528 = vrot.lane.b32.xlu0 %v324, 12
        %v529 = vpop.permute.xlu0 %528
        %530 = vrot.lane.b32.xlu0 %v325, 12
        %v531 = vpop.permute.xlu0 %530
        %532 = vrot.lane.b32.xlu0 %v326, 12
        %v533 = vpop.permute.xlu0 %532
        %534 = vrot.lane.b32.xlu0 %v327, 12
        %v535 = vpop.permute.xlu0 %534
        %536 = vrot.lane.b32.xlu0 %v328, 12
        %v537 = vpop.permute.xlu0 %536
        %538 = vrot.lane.b32.xlu0 %v329, 12
        %v539 = vpop.permute.xlu0 %538
        %540 = vrot.lane.b32.xlu0 %v330, 12
        %v541 = vpop.permute.xlu0 %540
        %542 = vrot.lane.b32.xlu0 %v331, 12
        %v543 = vpop.permute.xlu0 %542
        %544 = vrot.lane.b32.xlu0 %v332, 12
        %v545 = vpop.permute.xlu0 %544
        %546 = vrot.lane.b32.xlu0 %v333, 12
        %v547 = vpop.permute.xlu0 %546
        %548 = vrot.lane.b32.xlu0 %v334, 12
        %v549 = vpop.permute.xlu0 %548
        %550 = vrot.lane.b32.xlu0 %v335, 12
        %v551 = vpop.permute.xlu0 %550
        %552 = vrot.lane.b32.xlu0 %v368, 12
        %v553 = vpop.permute.xlu0 %552
        %554 = vrot.lane.b32.xlu0 %v369, 12
        %v555 = vpop.permute.xlu0 %554
        %574 = vrot.lane.b32.xlu0 %v338, 16
        %v575 = vpop.permute.xlu0 %574
        %576 = vrot.lane.b32.xlu0 %v339, 16
        %v577 = vpop.permute.xlu0 %576
        %578 = vrot.lane.b32.xlu0 %v340, 16
        %v579 = vpop.permute.xlu0 %578
        %580 = vrot.lane.b32.xlu0 %v341, 16
        %v581 = vpop.permute.xlu0 %580
        %582 = vrot.lane.b32.xlu0 %v342, 16
        %v583 = vpop.permute.xlu0 %582
        %584 = vrot.lane.b32.xlu0 %v343, 16
        %v585 = vpop.permute.xlu0 %584
        %586 = vrot.lane.b32.xlu0 %v344, 16
        %v587 = vpop.permute.xlu0 %586
        %588 = vrot.lane.b32.xlu0 %v345, 16
        %v589 = vpop.permute.xlu0 %588
        %590 = vrot.lane.b32.xlu0 %v346, 16
        %v591 = vpop.permute.xlu0 %590
        %592 = vrot.lane.b32.xlu0 %v347, 16
        %v593 = vpop.permute.xlu0 %592
        %594 = vrot.lane.b32.xlu0 %v348, 16
        %v595 = vpop.permute.xlu0 %594
        %596 = vrot.lane.b32.xlu0 %v349, 16
        %v597 = vpop.permute.xlu0 %596
        %598 = vrot.lane.b32.xlu0 %v350, 16
        %v599 = vpop.permute.xlu0 %598
        %600 = vrot.lane.b32.xlu0 %v351, 16
        %v601 = vpop.permute.xlu0 %600
        %602 = vrot.lane.b32.xlu0 %v370, 16
        %v603 = vpop.permute.xlu0 %602
        %604 = vrot.lane.b32.xlu0 %v371, 16
        %v605 = vpop.permute.xlu0 %604
        %624 = vrot.lane.b32.xlu0 %v354, 20
        %v625 = vpop.permute.xlu0 %624
        %626 = vrot.lane.b32.xlu0 %v355, 20
        %v627 = vpop.permute.xlu0 %626
        %628 = vrot.lane.b32.xlu0 %v356, 20
        %v629 = vpop.permute.xlu0 %628
        %630 = vrot.lane.b32.xlu0 %v357, 20
        %v631 = vpop.permute.xlu0 %630
        %632 = vrot.lane.b32.xlu0 %v358, 20
        %v633 = vpop.permute.xlu0 %632
        %634 = vrot.lane.b32.xlu0 %v359, 20
        %v635 = vpop.permute.xlu0 %634
        %636 = vrot.lane.b32.xlu0 %v360, 20
        %v637 = vpop.permute.xlu0 %636
        %638 = vrot.lane.b32.xlu0 %v361, 20
        %v639 = vpop.permute.xlu0 %638
        %640 = vrot.lane.b32.xlu0 %v362, 20
        %v641 = vpop.permute.xlu0 %640
        %642 = vrot.lane.b32.xlu0 %v363, 20
        %v643 = vpop.permute.xlu0 %642
        %644 = vrot.lane.b32.xlu0 %v364, 20
        %v645 = vpop.permute.xlu0 %644
        %646 = vrot.lane.b32.xlu0 %v365, 20
        %v647 = vpop.permute.xlu0 %646
        %648 = vrot.lane.b32.xlu0 %v366, 20
        %v649 = vpop.permute.xlu0 %648
        %650 = vrot.lane.b32.xlu0 %v367, 20
        %v651 = vpop.permute.xlu0 %650
        %652 = vrot.lane.b32.xlu0 %v372, 20
        %v653 = vpop.permute.xlu0 %652
        %654 = vrot.lane.b32.xlu0 %v373, 20
        %v655 = vpop.permute.xlu0 %654
        %674 = vrot.lane.b32.xlu0 %v324, 24
        %v675 = vpop.permute.xlu0 %674
        %676 = vrot.lane.b32.xlu0 %v325, 24
        %v677 = vpop.permute.xlu0 %676
        %678 = vrot.lane.b32.xlu0 %v326, 24
        %v679 = vpop.permute.xlu0 %678
        %680 = vrot.lane.b32.xlu0 %v327, 24
        %v681 = vpop.permute.xlu0 %680
        %682 = vrot.lane.b32.xlu0 %v328, 24
        %v683 = vpop.permute.xlu0 %682
        %684 = vrot.lane.b32.xlu0 %v329, 24
        %v685 = vpop.permute.xlu0 %684
        %686 = vrot.lane.b32.xlu0 %v330, 24
        %v687 = vpop.permute.xlu0 %686
        %688 = vrot.lane.b32.xlu0 %v331, 24
        %v689 = vpop.permute.xlu0 %688
        %690 = vrot.lane.b32.xlu0 %v332, 24
        %v691 = vpop.permute.xlu0 %690
        %692 = vrot.lane.b32.xlu0 %v333, 24
        %v693 = vpop.permute.xlu0 %692
        %694 = vrot.lane.b32.xlu0 %v334, 24
        %v695 = vpop.permute.xlu0 %694
        %696 = vrot.lane.b32.xlu0 %v335, 24
        %v697 = vpop.permute.xlu0 %696
        %698 = vrot.lane.b32.xlu0 %v368, 24
        %v699 = vpop.permute.xlu0 %698
        %700 = vrot.lane.b32.xlu0 %v369, 24
        %v701 = vpop.permute.xlu0 %700
        %702 = vrot.lane.b32.xlu0 %v374, 24
        %v703 = vpop.permute.xlu0 %702
        %704 = vrot.lane.b32.xlu0 %v375, 24
        %v705 = vpop.permute.xlu0 %704
        %724 = vrot.lane.b32.xlu0 %v340, 28
        %v725 = vpop.permute.xlu0 %724
        %726 = vrot.lane.b32.xlu0 %v341, 28
        %v727 = vpop.permute.xlu0 %726
        %728 = vrot.lane.b32.xlu0 %v342, 28
        %v729 = vpop.permute.xlu0 %728
        %730 = vrot.lane.b32.xlu0 %v343, 28
        %v731 = vpop.permute.xlu0 %730
        %732 = vrot.lane.b32.xlu0 %v344, 28
        %v733 = vpop.permute.xlu0 %732
        %734 = vrot.lane.b32.xlu0 %v345, 28
        %v735 = vpop.permute.xlu0 %734
        %736 = vrot.lane.b32.xlu0 %v346, 28
        %v737 = vpop.permute.xlu0 %736
        %738 = vrot.lane.b32.xlu0 %v347, 28
        %v739 = vpop.permute.xlu0 %738
        %740 = vrot.lane.b32.xlu0 %v348, 28
        %v741 = vpop.permute.xlu0 %740
        %742 = vrot.lane.b32.xlu0 %v349, 28
        %v743 = vpop.permute.xlu0 %742
        %744 = vrot.lane.b32.xlu0 %v350, 28
        %v745 = vpop.permute.xlu0 %744
        %746 = vrot.lane.b32.xlu0 %v351, 28
        %v747 = vpop.permute.xlu0 %746
        %748 = vrot.lane.b32.xlu0 %v370, 28
        %v749 = vpop.permute.xlu0 %748
        %750 = vrot.lane.b32.xlu0 %v371, 28
        %v751 = vpop.permute.xlu0 %750
        %752 = vrot.lane.b32.xlu0 %v376, 28
        %v753 = vpop.permute.xlu0 %752
        %754 = vrot.lane.b32.xlu0 %v377, 28
        %v755 = vpop.permute.xlu0 %754
        %774 = vrot.lane.b32.xlu0 %v356, 32
        %v775 = vpop.permute.xlu0 %774
        %776 = vrot.lane.b32.xlu0 %v357, 32
        %v777 = vpop.permute.xlu0 %776
        %778 = vrot.lane.b32.xlu0 %v358, 32
        %v779 = vpop.permute.xlu0 %778
        %780 = vrot.lane.b32.xlu0 %v359, 32
        %v781 = vpop.permute.xlu0 %780
        %782 = vrot.lane.b32.xlu0 %v360, 32
        %v783 = vpop.permute.xlu0 %782
        %784 = vrot.lane.b32.xlu0 %v361, 32
        %v785 = vpop.permute.xlu0 %784
        %786 = vrot.lane.b32.xlu0 %v362, 32
        %v787 = vpop.permute.xlu0 %786
        %788 = vrot.lane.b32.xlu0 %v363, 32
        %v789 = vpop.permute.xlu0 %788
        %790 = vrot.lane.b32.xlu0 %v364, 32
        %v791 = vpop.permute.xlu0 %790
        %792 = vrot.lane.b32.xlu0 %v365, 32
        %v793 = vpop.permute.xlu0 %792
        %794 = vrot.lane.b32.xlu0 %v366, 32
        %v795 = vpop.permute.xlu0 %794
        %796 = vrot.lane.b32.xlu0 %v367, 32
        %v797 = vpop.permute.xlu0 %796
        %798 = vrot.lane.b32.xlu0 %v372, 32
        %v799 = vpop.permute.xlu0 %798
        %800 = vrot.lane.b32.xlu0 %v373, 32
        %v801 = vpop.permute.xlu0 %800
        %802 = vrot.lane.b32.xlu0 %v378, 32
        %v803 = vpop.permute.xlu0 %802
        %804 = vrot.lane.b32.xlu0 %v379, 32
        %v805 = vpop.permute.xlu0 %804
        %v822 = vsel %vm298, %v320, %v397
        %v823 = vsel %vm298, %v321, %v399
        %v824 = vsel %vm298, %v322, %v401
        %v825 = vsel %vm298, %v323, %v403
        %v826 = vsel %vm298, %v324, %v405
        %v827 = vsel %vm298, %v325, %v407
        %v828 = vsel %vm298, %v326, %v409
        %v829 = vsel %vm298, %v327, %v411
        %v830 = vsel %vm298, %v328, %v413
        %v831 = vsel %vm298, %v329, %v415
        %v832 = vsel %vm298, %v330, %v417
        %v833 = vsel %vm298, %v331, %v419
        %v834 = vsel %vm298, %v332, %v421
        %v835 = vsel %vm298, %v333, %v423
        %v836 = vsel %vm298, %v334, %v425
        %v837 = vsel %vm298, %v335, %v427
        %vm838 = vcmask 64512
        %v839 = vsel %vm838, %v822, %v461
        %v840 = vsel %vm838, %v823, %v463
        %v841 = vsel %vm838, %v824, %v465
        %v842 = vsel %vm838, %v825, %v467
        %v843 = vsel %vm838, %v826, %v469
        %v844 = vsel %vm838, %v827, %v471
        %v845 = vsel %vm838, %v828, %v473
        %v846 = vsel %vm838, %v829, %v475
        %v847 = vsel %vm838, %v830, %v477
        %v848 = vsel %vm838, %v831, %v479
        %v849 = vsel %vm838, %v832, %v481
        %v850 = vsel %vm838, %v833, %v483
        %v851 = vsel %vm838, %v834, %v485
        %v852 = vsel %vm838, %v835, %v487
        %v853 = vsel %vm838, %v836, %v489
        %v854 = vsel %vm838, %v837, %v491
        %vm855 = vcmask 97280
        %v856 = vsel %vm855, %v839, %v525
        %v857 = vsel %vm855, %v840, %v527
        %v858 = vsel %vm855, %v841, %v529
        %v859 = vsel %vm855, %v842, %v531
        %v860 = vsel %vm855, %v843, %v533
        %v861 = vsel %vm855, %v844, %v535
        %v862 = vsel %vm855, %v845, %v537
        %v863 = vsel %vm855, %v846, %v539
        %v864 = vsel %vm855, %v847, %v541
        %v865 = vsel %vm855, %v848, %v543
        %v866 = vsel %vm855, %v849, %v545
        %v867 = vsel %vm855, %v850, %v547
        %v868 = vsel %vm855, %v851, %v549
        %v869 = vsel %vm855, %v852, %v551
        %v870 = vsel %vm855, %v853, %v553
        %v871 = vsel %vm855, %v854, %v555
        %vm872 = vcmask 130048
        %v873 = vsel %vm872, %v856, %v575
        %v874 = vsel %vm872, %v857, %v577
        %v875 = vsel %vm872, %v858, %v579
        %v876 = vsel %vm872, %v859, %v581
        %v877 = vsel %vm872, %v860, %v583
        %v878 = vsel %vm872, %v861, %v585
        %v879 = vsel %vm872, %v862, %v587
        %v880 = vsel %vm872, %v863, %v589
        %v881 = vsel %vm872, %v864, %v591
        %v882 = vsel %vm872, %v865, %v593
        %v883 = vsel %vm872, %v866, %v595
        %v884 = vsel %vm872, %v867, %v597
        %v885 = vsel %vm872, %v868, %v599
        %v886 = vsel %vm872, %v869, %v601
        %v887 = vsel %vm872, %v870, %v603
        %v888 = vsel %vm872, %v871, %v605
        %vm889 = vcmask 162816
        %v890 = vsel %vm889, %v873, %v625
        %v891 = vsel %vm889, %v874, %v627
        %v892 = vsel %vm889, %v875, %v629
        %v893 = vsel %vm889, %v876, %v631
        %v894 = vsel %vm889, %v877, %v633
        %v895 = vsel %vm889, %v878, %v635
        %v896 = vsel %vm889, %v879, %v637
        %v897 = vsel %vm889, %v880, %v639
        %v898 = vsel %vm889, %v881, %v641
        %v899 = vsel %vm889, %v882, %v643
        %v900 = vsel %vm889, %v883, %v645
        %v901 = vsel %vm889, %v884, %v647
        %v902 = vsel %vm889, %v885, %v649
        %v903 = vsel %vm889, %v886, %v651
        %v904 = vsel %vm889, %v887, %v653
        %v905 = vsel %vm889, %v888, %v655
        %vm906 = vcmask 195584
        %v907 = vsel %vm906, %v890, %v675
        %v908 = vsel %vm906, %v891, %v677
        %v909 = vsel %vm906, %v892, %v679
        %v910 = vsel %vm906, %v893, %v681
        %v911 = vsel %vm906, %v894, %v683
        %v912 = vsel %vm906, %v895, %v685
        %v913 = vsel %vm906, %v896, %v687
        %v914 = vsel %vm906, %v897, %v689
        %v915 = vsel %vm906, %v898, %v691
        %v916 = vsel %vm906, %v899, %v693
        %v917 = vsel %vm906, %v900, %v695
        %v918 = vsel %vm906, %v901, %v697
        %v919 = vsel %vm906, %v902, %v699
        %v920 = vsel %vm906, %v903, %v701
        %v921 = vsel %vm906, %v904, %v703
        %v922 = vsel %vm906, %v905, %v705
        %vm923 = vcmask 228352
        %v924 = vsel %vm923, %v907, %v725
        %v925 = vsel %vm923, %v908, %v727
        %v926 = vsel %vm923, %v909, %v729
        %v927 = vsel %vm923, %v910, %v731
        %v928 = vsel %vm923, %v911, %v733
        %v929 = vsel %vm923, %v912, %v735
        %v930 = vsel %vm923, %v913, %v737
        %v931 = vsel %vm923, %v914, %v739
        %v932 = vsel %vm923, %v915, %v741
        %v933 = vsel %vm923, %v916, %v743
        %v934 = vsel %vm923, %v917, %v745
        %v935 = vsel %vm923, %v918, %v747
        %v936 = vsel %vm923, %v919, %v749
        %v937 = vsel %vm923, %v920, %v751
        %v938 = vsel %vm923, %v921, %v753
        %v939 = vsel %vm923, %v922, %v755
        %vm940 = vcmask 261120
        %v941 = vsel %vm940, %v924, %v775
        %v942 = vsel %vm940, %v925, %v777
        %v943 = vsel %vm940, %v926, %v779
        %v944 = vsel %vm940, %v927, %v781
        %v945 = vsel %vm940, %v928, %v783
        %v946 = vsel %vm940, %v929, %v785
        %v947 = vsel %vm940, %v930, %v787
        %v948 = vsel %vm940, %v931, %v789
        %v949 = vsel %vm940, %v932, %v791
        %v950 = vsel %vm940, %v933, %v793
        %v951 = vsel %vm940, %v934, %v795
        %v952 = vsel %vm940, %v935, %v797
        %v953 = vsel %vm940, %v936, %v799
        %v954 = vsel %vm940, %v937, %v801
        %v955 = vsel %vm940, %v938, %v803
        %v956 = vsel %vm940, %v939, %v805
        %v957 = vld [vmem:[%s1] sm:$0xff]
        %v958 = vld [vmem:[%s1 + $0x8] sm:$0xff]
        %v959 = vld [vmem:[%s1 + $0x10] sm:$0xff]
        %v960 = vld [vmem:[%s1 + $0x18] sm:$0xff]
        %v961 = vld [vmem:[%s1 + $0x20] sm:$0xf]
        %v962 = vld [vmem:[%s2] sm:$0x1]
        %v964 = vperm.slane %v962, 0
        %vm966 = vcmask 293888
        %v968 = vsel %vm966, %v941, 0
        %v971 = vsel %vm966, %v942, 0
        %v974 = vsel %vm966, %v943, 0
        %v977 = vsel %vm966, %v944, 0
        %v980 = vsel %vm966, %v945, 0
        %v983 = vsel %vm966, %v946, 0
        %v986 = vsel %vm966, %v947, 0
        %v989 = vsel %vm966, %v948, 0
        %v992 = vsel %vm966, %v949, 0
        %v995 = vsel %vm966, %v950, 0
        %v998 = vsel %vm966, %v951, 0
        %v1001 = vsel %vm966, %v952, 0
        %v1004 = vsel %vm966, %v953, 0
        %v1007 = vsel %vm966, %v954, 0
        %v1010 = vsel %vm966, %v955, 0
        %v1013 = vsel %vm966, %v956, 0
        %vm1015 = vcmask 1043456
        %v1017 = vsel %vm1015, %v961, 0
        %1019 = vmatpush.msra.mxu0 0.0
        %1020 = vmatpush.msra.mxu0 0.0
        %1021 = vmatpush.msra.mxu0 0.0
        %1022 = vmatpush.msra.mxu0 0.0
        %1023 = vmatpush.msra.mxu0 0.0
        %1024 = vmatpush.msra.mxu0 0.0
        %1025 = vmatpush.msra.mxu0 0.0
        %1026 = vmatpush.msra.mxu0 0.0
        %1027 = vmatpush.msra.mxu0 0.0
        %1028 = vmatpush.msra.mxu0 0.0
        %1029 = vmatpush.msra.mxu0 0.0
        %1030 = vmatpush.msra.mxu0 %v1017
        %1031 = vmatpush.msra.mxu0 %v960
        %1032 = vmatpush.msra.mxu0 %v959
        %1033 = vmatpush.msra.mxu0 %v958
        %1034 = vmatpush.msra.mxu0 %v957
        %1035 = vmatmul.f32.gmra.mxu0 %v968
        %v1036 = vpop.f32.mrf.mxu0
        %v1037 = vadd.f32 %v964, %v1036
        %1038 = vmatmul.f32.gmra.mxu0 %v971
        %v1039 = vpop.f32.mrf.mxu0
        %v1040 = vadd.f32 %v964, %v1039
        %1041 = vmatmul.f32.gmra.mxu0 %v974
        %v1042 = vpop.f32.mrf.mxu0
        %v1043 = vadd.f32 %v964, %v1042
        %1044 = vmatmul.f32.gmra.mxu0 %v977
        %v1045 = vpop.f32.mrf.mxu0
        %v1046 = vadd.f32 %v964, %v1045
        %1047 = vmatmul.f32.gmra.mxu0 %v980
        %v1048 = vpop.f32.mrf.mxu0
        %v1049 = vadd.f32 %v964, %v1048
        %1050 = vmatmul.f32.gmra.mxu0 %v983
        %v1051 = vpop.f32.mrf.mxu0
        %v1052 = vadd.f32 %v964, %v1051
        %1053 = vmatmul.f32.gmra.mxu0 %v986
        %v1054 = vpop.f32.mrf.mxu0
        %v1055 = vadd.f32 %v964, %v1054
        %1056 = vmatmul.f32.gmra.mxu0 %v989
        %v1057 = vpop.f32.mrf.mxu0
        %v1058 = vadd.f32 %v964, %v1057
        %1059 = vmatmul.f32.gmra.mxu0 %v992
        %v1060 = vpop.f32.mrf.mxu0
        %v1061 = vadd.f32 %v964, %v1060
        %1062 = vmatmul.f32.gmra.mxu0 %v995
        %v1063 = vpop.f32.mrf.mxu0
        %v1064 = vadd.f32 %v964, %v1063
        %1065 = vmatmul.f32.gmra.mxu0 %v998
        %v1066 = vpop.f32.mrf.mxu0
        %v1067 = vadd.f32 %v964, %v1066
        %1068 = vmatmul.f32.gmra.mxu0 %v1001
        %v1069 = vpop.f32.mrf.mxu0
        %v1070 = vadd.f32 %v964, %v1069
        %1071 = vmatmul.f32.gmra.mxu0 %v1004
        %v1072 = vpop.f32.mrf.mxu0
        %v1073 = vadd.f32 %v964, %v1072
        %1074 = vmatmul.f32.gmra.mxu0 %v1007
        %v1075 = vpop.f32.mrf.mxu0
        %v1076 = vadd.f32 %v964, %v1075
        %1077 = vmatmul.f32.gmra.mxu0 %v1010
        %v1078 = vpop.f32.mrf.mxu0
        %v1079 = vadd.f32 %v964, %v1078
        %1080 = vmatmul.f32.gmra.mxu0 %v1013
        %v1081 = vpop.f32.mrf.mxu0
        %v1082 = vadd.f32 %v964, %v1081
        %1083 = vdwg.mxu0
        %v1084 = vmax.f32 %v1037, 0.0
        %v1085 = vmax.f32 %v1040, 0.0
        %v1086 = vmax.f32 %v1043, 0.0
        %v1087 = vmax.f32 %v1046, 0.0
        %v1088 = vmax.f32 %v1049, 0.0
        %v1089 = vmax.f32 %v1052, 0.0
        %v1090 = vmax.f32 %v1055, 0.0
        %v1091 = vmax.f32 %v1058, 0.0
        %v1092 = vmax.f32 %v1061, 0.0
        %v1093 = vmax.f32 %v1064, 0.0
        %v1094 = vmax.f32 %v1067, 0.0
        %v1095 = vmax.f32 %v1070, 0.0
        %v1096 = vmax.f32 %v1073, 0.0
        %v1097 = vmax.f32 %v1076, 0.0
        %v1098 = vmax.f32 %v1079, 0.0
        %v1099 = vmax.f32 %v1082, 0.0
        %1100 = vst [vmem:[%s163] sm:$0xff] %v1084
        %1101 = vst [vmem:[%s163 + $0x8] sm:$0xff] %v1085
        %1102 = vst [vmem:[%s163 + $0x10] sm:$0xff] %v1086
        %1103 = vst [vmem:[%s163 + $0x18] sm:$0xff] %v1087
        %1104 = vst [vmem:[%s163 + $0x20] sm:$0xff] %v1088
        %1105 = vst [vmem:[%s163 + $0x28] sm:$0xff] %v1089
        %1106 = vst [vmem:[%s163 + $0x30] sm:$0xff] %v1090
        %1107 = vst [vmem:[%s163 + $0x38] sm:$0xff] %v1091
        %1108 = vst [vmem:[%s163 + $0x40] sm:$0xff] %v1092
        %1109 = vst [vmem:[%s163 + $0x48] sm:$0xff] %v1093
        %1110 = vst [vmem:[%s163 + $0x50] sm:$0xff] %v1094
        %1111 = vst [vmem:[%s163 + $0x58] sm:$0xff] %v1095
        %1112 = vst [vmem:[%s163 + $0x60] sm:$0xff] %v1096
        %1113 = vst [vmem:[%s163 + $0x68] sm:$0xff] %v1097
        %1114 = vst [vmem:[%s163 + $0x70] sm:$0xff] %v1098
        %1115 = vst [vmem:[%s163 + $0x78] sm:$0xff] %v1099
        %s1116 = sand.u32 %s93, 1
        %s1117 = scalar_lea.sflag [#allocation4], %s1116
        %s1118 = sand.u32 %s93, 1
        %s1119 = smul.addr %s1118, 128
        %s1120 = scalar_lea.vmem [#allocation3], %s1119
        // Predicated region
        $region33: #{tpu_custom_call.1} parent=31 // pred_check
          %p1121 = pneg %p103
        $region34: #{tpu_custom_call.1} parent=31 // pred_check_branch
          %1123 = sbr.rel (%p1121) target = $region36
        $region35: #{tpu_custom_call.1} parent=31 // pred_region
          %1125 = vsyncadd %s1117, 0
          %s1126 = smul.addr %s17, 16
          %s1127 = smul.addr %s1126, 8
          %s1128 = scalar_lea.hbm %s3, %s1127
          %s1129 = sshll.u32 %s1120, 4
          %s1130 = int_to_ptr.vmem [resolvable:$true] %s1129
          %s1131 = sshll.u32 %s1128, 4
          %s1132 = int_to_ptr.hbm [resolvable:$true] %s1131
          %1137 = dma.vmem_to_hbm [thread:$0]  %s1130, 2048, %s1132, %s1117, 128, 128, 8
        $region36: #{tpu_custom_call.1} parent=31 // pred_fallthru
          _
      $region32: #{tpu_custom_call.1} parent=5 // pred_fallthru
        _
      %p1138 = scmp.le.s32.totalorder 2, %s12
      // Predicated region
      $region37: #{tpu_custom_call.1} parent=5 // pred_check
        %p1139 = pneg %p1138
      $region38: #{tpu_custom_call.1} parent=5 // pred_check_branch
        %1141 = sbr.rel (%p1139) target = $region40
      $region39: #{tpu_custom_call.1} parent=5 // pred_region
        %s1142 = ssub.s32 %s12, 2
        // Predicated region
        $region41: #{tpu_custom_call.1} parent=39 // pred_check
          %p1143 = pneg %p109
        $region42: #{tpu_custom_call.1} parent=39 // pred_check_branch
          %1145 = sbr.rel (%p1143) target = $region44
        $region43: #{tpu_custom_call.1} parent=39 // pred_region
          %s1146 = sand.u32 %s94, 1
          %s1147 = scalar_lea.sflag [#allocation4], %s1146
          %s1148 = sand.u32 %s94, 1
          %s1149 = smul.addr %s1148, 128
          %s1150 = scalar_lea.vmem [#allocation3], %s1149
          %1152 = dma.done %s1147, 2048
        $region44: #{tpu_custom_call.1} parent=39 // pred_fallthru
          _
      $region40: #{tpu_custom_call.1} parent=5 // pred_fallthru
        _
    $region6: #{tpu_custom_call.1} parent=1 // loop_footer
      %s16 = sadd.s32 1, %s12
    $region7: #{tpu_custom_call.1} parent=1 // loop_footer_branch
      %11 = sbr.rel target = $region3
    $region8: #{tpu_custom_call.1} parent=1 // loop_exit
      _
    %1153 = vsyncpa [#allocation4], 1
    %s1154 = scalar_lea.sflag [#allocation4], 1
    %1155 = vsyncpa %s1154, 1

</llo_original>
